<compile_context>
chip_gen: v6e
topology: v6e:2x2x1
jax: 0.10.0
libtpu: 0.0.40
codegen_flags: <defaults>
</compile_context>

<pallas_src>
import functools

import jax
import jax.numpy as jnp
from jax.experimental import pallas as pl
from jax.experimental.pallas import tpu as pltpu

_LANE = 128
_NEG_INF = -1e30


def _round_up(x, m):
    return ((x + m - 1) // m) * m


def dan_kernel(idx_ref, invlen_ref, emb_ref, w1_ref, b1_ref, w2_ref, b2_ref,
               out_ref, acc_ref, *, n_classes, is_prob, slab, count_dtype):
    vi = pl.program_id(1)                       # vocab-tile index (reduction)

    tb, seq = idx_ref.shape
    tv = emb_ref.shape[0]

    @pl.when(vi == 0)
    def _init():
        acc_ref[...] = jnp.zeros_like(acc_ref)

    idx = idx_ref[...]                          # (TB, S) int32

    # Histogram + matmul, one 128/256-lane slab at a time so the register
    # accumulator (TB, slab) stays well inside the 64-vreg file.
    for sl in range(tv // slab):
        base = vi * tv + sl * slab
        lane_row = jax.lax.broadcasted_iota(jnp.int32, (1, slab), 1) + base

        if seq <= 64:
            # Static unroll; accumulator carried in vregs (no VMEM RMW).
            counts = jnp.zeros((tb, slab), jnp.int32)
            for si in range(seq):
                tok = idx[:, si:si + 1]                       # (TB, 1)
                counts = counts + (tok == lane_row).astype(jnp.int32)
        else:
            # Bounded unroll for long sequences (code-size / live-range control).
            def body(si, counts):
                tok = jax.lax.dynamic_slice_in_dim(idx, si, 1, axis=1)
                return counts + (tok == lane_row).astype(jnp.int32)
            counts = jax.lax.fori_loop(0, seq, body,
                                       jnp.zeros((tb, slab), jnp.int32),
                                       unroll=8)

        counts_mx = counts.astype(jnp.float32).astype(count_dtype)
        # emb[idx].sum(axis=1) == sum over vocab slabs of counts_slab @ emb_slab
        # (relies on emb[padding_idx] == 0, guaranteed by init_params).
        acc_ref[...] += jnp.dot(counts_mx,
                                emb_ref[sl * slab:(sl + 1) * slab, :],
                                preferred_element_type=jnp.float32)

    @pl.when(vi == pl.num_programs(1) - 1)
    def _finalize():
        avg = acc_ref[...] * invlen_ref[...]                  # (TB, E_pad)
        h = jnp.dot(avg, w1_ref[...],
                    preferred_element_type=jnp.float32) + b1_ref[...]
        h = jnp.maximum(h, 0.0)
        # dropout == identity at inference
        logits = jnp.dot(h, w2_ref[...],
                         preferred_element_type=jnp.float32) + b2_ref[...]
        if is_prob:
            # softmax over real classes only (mask lane padding)
            col = jax.lax.broadcasted_iota(jnp.int32, logits.shape, 1)
            masked = jnp.where(col < n_classes, logits, _NEG_INF)
            m = jnp.max(masked, axis=1, keepdims=True)
            e = jnp.exp(masked - m)
            logits = e * pl.reciprocal(jnp.sum(e, axis=1, keepdims=True),
                                       approx=True)
        out_ref[...] = logits


def dan_forward(input_text, text_len, params, *, is_prob=False,
                batch_tile=128, emb_tile_budget_bytes=24 << 20):
    emb, w1, b1, w2, b2 = params
    B, S = input_text.shape
    V, E = emb.shape
    H = w1.shape[1]
    C = w2.shape[1]

    E_p = _round_up(E, _LANE)
    H_p = _round_up(H, _LANE)
    C_p = _round_up(C, _LANE)

    # Batch tile: no full pad-to-128 for small batches; keep >=2 tiles for
    # megacore when the batch is large enough to split on 8-row boundaries.
    TB = min(batch_tile, _round_up(B, 8))
    if B >= 16 and _round_up(B, TB) == TB:          # would be a single tile
        TB = _round_up((B + 1) // 2, 8)
    B_p = _round_up(B, TB)

    # Vocab tile sized from a VMEM budget for the (double-buffered, bf16)
    # emb-tile stream; degenerates to a single resident tile when it fits.
    V_128 = _round_up(V, _LANE)
    tv_budget = max(_LANE,
                    (emb_tile_budget_bytes // (2 * E_p * 2)) // _LANE * _LANE)
    n_vtiles = -(-V_128 // tv_budget)
    TV = _round_up(-(-V_128 // n_vtiles), _LANE)
    V_p = TV * n_vtiles

    # Histogram slab width (register-accumulator sizing).
    slab = min(TV, 256 if TB <= 64 else 128)

    # bf16 counts are exact for integer counts <= 256.
    count_dtype = jnp.bfloat16 if S <= 256 else jnp.float32

    f32 = jnp.float32
    bf16 = jnp.bfloat16
    # Zero-pad params (zeros are exact no-ops for all downstream matmuls).
    emb_p = jnp.zeros((V_p, E_p), bf16).at[:V, :E].set(emb.astype(bf16))
    w1_p = jnp.zeros((E_p, H_p), f32).at[:E, :H].set(w1.astype(f32))
    b1_p = jnp.zeros((1, H_p), f32).at[:, :H].set(b1.reshape(1, H).astype(f32))
    w2_p = jnp.zeros((H_p, C_p), f32).at[:H, :C].set(w2.astype(f32))
    b2_p = jnp.zeros((1, C_p), f32).at[:, :C].set(b2.reshape(1, C).astype(f32))

    idx_p = jnp.zeros((B_p, S), jnp.int32).at[:B, :].set(
        input_text.astype(jnp.int32))
    inv_len = 1.0 / text_len.reshape(B, 1).astype(f32)
    inv_p = jnp.zeros((B_p, 1), f32).at[:B, :].set(inv_len)   # padded rows -> 0

    grid = (B_p // TB, V_p // TV)

    # Explicit VMEM budget: double-buffered tiles + scratch + headroom,
    # capped below v7x's 64 MiB physical VMEM.
    tile_bytes = (
        2 * TB * S * 4 + 2 * TB * 4                      # token ids + 1/len
        + 2 * TV * E_p * 2                               # emb tiles (bf16)
        + 2 * (E_p * H_p + H_p + H_p * C_p + C_p) * 4    # weights
        + 2 * TB * C_p * 4                               # output tile
        + TB * E_p * 4)                                  # accumulator scratch
    vmem_limit = int(min(tile_bytes + (8 << 20), 48 << 20))

    kernel = functools.partial(dan_kernel, n_classes=C, is_prob=is_prob,
                               slab=slab, count_dtype=count_dtype)

    out = pl.pallas_call(
        kernel,
        out_shape=jax.ShapeDtypeStruct((B_p, C_p), f32),
        grid_spec=pltpu.PrefetchScalarGridSpec(
            num_scalar_prefetch=0,
            grid=grid,
            in_specs=[
                pl.BlockSpec((TB, S), lambda bi, vi: (bi, 0)),    # token ids
                pl.BlockSpec((TB, 1), lambda bi, vi: (bi, 0)),    # 1 / text_len
                pl.BlockSpec((TV, E_p), lambda bi, vi: (vi, 0)),  # emb tile
                pl.BlockSpec((E_p, H_p), lambda bi, vi: (0, 0)),  # W1
                pl.BlockSpec((1, H_p), lambda bi, vi: (0, 0)),    # b1
                pl.BlockSpec((H_p, C_p), lambda bi, vi: (0, 0)),  # W2
                pl.BlockSpec((1, C_p), lambda bi, vi: (0, 0)),    # b2
            ],
            out_specs=pl.BlockSpec((TB, C_p), lambda bi, vi: (bi, 0)),
            scratch_shapes=[
                pltpu.VMEM((TB, E_p), f32),  # embedding-sum accumulator
            ]),
        compiler_params=pltpu.CompilerParams(
            dimension_semantics=("parallel", "arbitrary"),
            vmem_limit_bytes=vmem_limit),
    )(idx_p, inv_p, emb_p, w1_p, b1_p, w2_p, b2_p)

    return out[:B, :C]


def init_params(key, vocab_size, emb_dim, n_hidden, n_classes, padding_idx=0):
    k_emb, k_w1, k_b1, k_w2, k_b2 = jax.random.split(key, 5)

    # nn.Embedding default: N(0, 1), padding_idx row zeroed (required for the
    # counts @ emb identity used by the kernel).
    emb = jax.random.normal(k_emb, (vocab_size, emb_dim), jnp.float32)
    emb = emb.at[padding_idx].set(0.0)

    # nn.Linear default: U(-1/sqrt(fan_in), 1/sqrt(fan_in)); stored (in, out).
    k1 = 1.0 / jnp.sqrt(jnp.float32(emb_dim))
    w1 = jax.random.uniform(k_w1, (emb_dim, n_hidden), jnp.float32, -k1, k1)
    b1 = jax.random.uniform(k_b1, (1, n_hidden), jnp.float32, -k1, k1)

    k2 = 1.0 / jnp.sqrt(jnp.float32(n_hidden))
    w2 = jax.random.uniform(k_w2, (n_hidden, n_classes), jnp.float32, -k2, k2)
    b2 = jax.random.uniform(k_b2, (1, n_classes), jnp.float32, -k2, k2)

    return emb, w1, b1, w2, b2


def reference_forward(input_text, text_len, params, *, is_prob=False):
    """Plain-JAX reference matching the PyTorch forward."""
    emb, w1, b1, w2, b2 = params
    embd = jnp.take(emb, input_text, axis=0)                 # (B, S, E)
    avg = embd.sum(axis=1) / text_len.reshape(-1, 1)         # (B, E)
    h = jnp.maximum(avg @ w1 + b1, 0.0)
    logits = h @ w2 + b2
    if is_prob:
        logits = jax.nn.softmax(logits, axis=1)
    return logits


if __name__ == "__main__":
    # Small, module-consistent shapes.
    B, S = 8, 16          # batch x question_list (sequence length)
    V, E = 128, 32        # vocab_size, emb_dim
    H, C = 32, 8          # n_hidden_units, n_classes
    PAD = 0

    key = jax.random.PRNGKey(0)
    k_params, k_tok, k_len = jax.random.split(key, 3)

    params = init_params(k_params, V, E, H, C, padding_idx=PAD)

    # Random token ids in [1, V); pad positions beyond each example's length.
    lengths = jax.random.randint(k_len, (B,), 4, S + 1)               # (B,)
    tokens = jax.random.randint(k_tok, (B, S), 1, V)
    pos = jnp.arange(S)[None, :]
    input_text = jnp.where(pos < lengths[:, None], tokens, PAD).astype(jnp.int32)
    text_len = lengths.astype(jnp.float32)

    # Logits path.
    logits = dan_forward(input_text, text_len, params, is_prob=False)
    logits = jax.block_until_ready(logits)

    # Softmax (is_prob=True) path.
    probs = dan_forward(input_text, text_len, params, is_prob=True)
    probs = jax.block_until_ready(probs)

    # References: full f32, and one with the embedding rounded to bf16 (the
    # kernel streams the table in bf16) for a tight kernel-logic check.
    ref_logits = reference_forward(input_text, text_len, params, is_prob=False)
    ref_probs = reference_forward(input_text, text_len, params, is_prob=True)
    params_bf = (params[0].astype(jnp.bfloat16).astype(jnp.float32),) + params[1:]
    ref_logits_bf = reference_forward(input_text, text_len, params_bf, is_prob=False)
    ref_probs_bf = reference_forward(input_text, text_len, params_bf, is_prob=True)

    assert jnp.allclose(logits, ref_logits_bf, atol=5e-3, rtol=5e-3)
    assert jnp.allclose(probs, ref_probs_bf, atol=1e-2, rtol=1e-2)
    assert jnp.allclose(logits, ref_logits, atol=3e-2, rtol=3e-2)
    assert jnp.allclose(probs, ref_probs, atol=3e-2, rtol=3e-2)

    print("KERNEL_OK")
</pallas_src>

<mosaic_0001>
module attributes {stable_mosaic.version = 11 : i64} {
  func.func @dan_kernel(%arg0: i32, %arg1: i32, %arg2: memref<8x16xi32, #tpu.memory_space<vmem>>, %arg3: memref<8x1xf32, #tpu.memory_space<vmem>>, %arg4: memref<128x128xbf16, #tpu.memory_space<vmem>>, %arg5: memref<128x128xf32, #tpu.memory_space<vmem>>, %arg6: memref<1x128xf32, #tpu.memory_space<vmem>>, %arg7: memref<128x128xf32, #tpu.memory_space<vmem>>, %arg8: memref<1x128xf32, #tpu.memory_space<vmem>>, %arg9: memref<8x128xf32, #tpu.memory_space<vmem>>, %arg10: memref<8x128xf32, #tpu.memory_space<vmem>>) attributes {dimension_semantics = [#tpu.dimension_semantics<parallel>, #tpu.dimension_semantics<arbitrary>], iteration_bounds = array<i64: 1, 1>, scalar_prefetch = 0 : i64, scratch_operands = 1 : i64, tpu.core_type = #tpu.core_type<tc>, window_params = [{transform_indices = @transform_0, window_bounds = array<i64: 8, 16>}, {transform_indices = @transform_1, window_bounds = array<i64: 8, 1>}, {transform_indices = @transform_2, window_bounds = array<i64: 128, 128>}, {pipeline_mode = #tpu.pipeline_mode<synchronous>, transform_indices = @transform_3, window_bounds = array<i64: 128, 128>}, {pipeline_mode = #tpu.pipeline_mode<synchronous>, transform_indices = @transform_4, window_bounds = array<i64: 1, 128>}, {pipeline_mode = #tpu.pipeline_mode<synchronous>, transform_indices = @transform_5, window_bounds = array<i64: 128, 128>}, {pipeline_mode = #tpu.pipeline_mode<synchronous>, transform_indices = @transform_6, window_bounds = array<i64: 1, 128>}, {transform_indices = @transform_7, window_bounds = array<i64: 8, 128>}]} {
    %c0_i32 = arith.constant 0 : i32
    %0 = arith.cmpi eq, %arg1, %c0_i32 : i32
    %1 = arith.extui %0 : i1 to i32
    %c0_i32_0 = arith.constant 0 : i32
    %2 = arith.cmpi ne, %1, %c0_i32_0 : i32
    scf.if %2 {
      %cst_12 = arith.constant 0.000000e+00 : f32
      %116 = vector.broadcast %cst_12 : f32 to vector<8x128xf32>
      %c0_13 = arith.constant 0 : index
      %c0_14 = arith.constant 0 : index
      %117 = vector.load %arg10[%c0_13, %c0_14] : memref<8x128xf32, #tpu.memory_space<vmem>>, vector<8x128xf32>
      tpu.vector_store %arg10[%c0_13, %c0_14], %116 {strides = array<i32>} : memref<8x128xf32, #tpu.memory_space<vmem>>, vector<8x128xf32>,
    } else {
    }
    %c0 = arith.constant 0 : index
    %c0_1 = arith.constant 0 : index
    %3 = vector.load %arg2[%c0, %c0_1] : memref<8x16xi32, #tpu.memory_space<vmem>>, vector<8x16xi32>
    %c128_i32 = arith.constant 128 : i32
    %4 = arith.muli %arg1, %c128_i32 : i32
    %c0_i32_2 = arith.constant 0 : i32
    %5 = arith.addi %4, %c0_i32_2 : i32
    %6 = tpu.iota {dimensions = array<i32: 1>} : vector<1x128xi32>
    %7 = vector.broadcast %5 : i32 to vector<1x128xi32>
    %8 = arith.addi %6, %7 : vector<1x128xi32>
    %c0_i32_3 = arith.constant 0 : i32
    %9 = vector.broadcast %c0_i32_3 : i32 to vector<8x128xi32>
    %10 = vector.extract_strided_slice %3 {offsets = [0, 0], sizes = [8, 1], strides = [1, 1]} : vector<8x16xi32> to vector<8x1xi32>
    %11 = vector.broadcast %10 : vector<8x1xi32> to vector<8x128xi32>
    %12 = vector.broadcast %8 : vector<1x128xi32> to vector<8x128xi32>
    %13 = arith.cmpi eq, %11, %12 : vector<8x128xi32>
    %14 = arith.extui %13 : vector<8x128xi1> to vector<8x128xi32>
    %15 = arith.addi %9, %14 : vector<8x128xi32>
    %16 = vector.extract_strided_slice %3 {offsets = [0, 1], sizes = [8, 1], strides = [1, 1]} : vector<8x16xi32> to vector<8x1xi32>
    %17 = vector.broadcast %16 : vector<8x1xi32> to vector<8x128xi32>
    %18 = vector.broadcast %8 : vector<1x128xi32> to vector<8x128xi32>
    %19 = arith.cmpi eq, %17, %18 : vector<8x128xi32>
    %20 = arith.extui %19 : vector<8x128xi1> to vector<8x128xi32>
    %21 = arith.addi %15, %20 : vector<8x128xi32>
    %22 = vector.extract_strided_slice %3 {offsets = [0, 2], sizes = [8, 1], strides = [1, 1]} : vector<8x16xi32> to vector<8x1xi32>
    %23 = vector.broadcast %22 : vector<8x1xi32> to vector<8x128xi32>
    %24 = vector.broadcast %8 : vector<1x128xi32> to vector<8x128xi32>
    %25 = arith.cmpi eq, %23, %24 : vector<8x128xi32>
    %26 = arith.extui %25 : vector<8x128xi1> to vector<8x128xi32>
    %27 = arith.addi %21, %26 : vector<8x128xi32>
    %28 = vector.extract_strided_slice %3 {offsets = [0, 3], sizes = [8, 1], strides = [1, 1]} : vector<8x16xi32> to vector<8x1xi32>
    %29 = vector.broadcast %28 : vector<8x1xi32> to vector<8x128xi32>
    %30 = vector.broadcast %8 : vector<1x128xi32> to vector<8x128xi32>
    %31 = arith.cmpi eq, %29, %30 : vector<8x128xi32>
    %32 = arith.extui %31 : vector<8x128xi1> to vector<8x128xi32>
    %33 = arith.addi %27, %32 : vector<8x128xi32>
    %34 = vector.extract_strided_slice %3 {offsets = [0, 4], sizes = [8, 1], strides = [1, 1]} : vector<8x16xi32> to vector<8x1xi32>
    %35 = vector.broadcast %34 : vector<8x1xi32> to vector<8x128xi32>
    %36 = vector.broadcast %8 : vector<1x128xi32> to vector<8x128xi32>
    %37 = arith.cmpi eq, %35, %36 : vector<8x128xi32>
    %38 = arith.extui %37 : vector<8x128xi1> to vector<8x128xi32>
    %39 = arith.addi %33, %38 : vector<8x128xi32>
    %40 = vector.extract_strided_slice %3 {offsets = [0, 5], sizes = [8, 1], strides = [1, 1]} : vector<8x16xi32> to vector<8x1xi32>
    %41 = vector.broadcast %40 : vector<8x1xi32> to vector<8x128xi32>
    %42 = vector.broadcast %8 : vector<1x128xi32> to vector<8x128xi32>
    %43 = arith.cmpi eq, %41, %42 : vector<8x128xi32>
    %44 = arith.extui %43 : vector<8x128xi1> to vector<8x128xi32>
    %45 = arith.addi %39, %44 : vector<8x128xi32>
    %46 = vector.extract_strided_slice %3 {offsets = [0, 6], sizes = [8, 1], strides = [1, 1]} : vector<8x16xi32> to vector<8x1xi32>
    %47 = vector.broadcast %46 : vector<8x1xi32> to vector<8x128xi32>
    %48 = vector.broadcast %8 : vector<1x128xi32> to vector<8x128xi32>
    %49 = arith.cmpi eq, %47, %48 : vector<8x128xi32>
    %50 = arith.extui %49 : vector<8x128xi1> to vector<8x128xi32>
    %51 = arith.addi %45, %50 : vector<8x128xi32>
    %52 = vector.extract_strided_slice %3 {offsets = [0, 7], sizes = [8, 1], strides = [1, 1]} : vector<8x16xi32> to vector<8x1xi32>
    %53 = vector.broadcast %52 : vector<8x1xi32> to vector<8x128xi32>
    %54 = vector.broadcast %8 : vector<1x128xi32> to vector<8x128xi32>
    %55 = arith.cmpi eq, %53, %54 : vector<8x128xi32>
    %56 = arith.extui %55 : vector<8x128xi1> to vector<8x128xi32>
    %57 = arith.addi %51, %56 : vector<8x128xi32>
    %58 = vector.extract_strided_slice %3 {offsets = [0, 8], sizes = [8, 1], strides = [1, 1]} : vector<8x16xi32> to vector<8x1xi32>
    %59 = vector.broadcast %58 : vector<8x1xi32> to vector<8x128xi32>
    %60 = vector.broadcast %8 : vector<1x128xi32> to vector<8x128xi32>
    %61 = arith.cmpi eq, %59, %60 : vector<8x128xi32>
    %62 = arith.extui %61 : vector<8x128xi1> to vector<8x128xi32>
    %63 = arith.addi %57, %62 : vector<8x128xi32>
    %64 = vector.extract_strided_slice %3 {offsets = [0, 9], sizes = [8, 1], strides = [1, 1]} : vector<8x16xi32> to vector<8x1xi32>
    %65 = vector.broadcast %64 : vector<8x1xi32> to vector<8x128xi32>
    %66 = vector.broadcast %8 : vector<1x128xi32> to vector<8x128xi32>
    %67 = arith.cmpi eq, %65, %66 : vector<8x128xi32>
    %68 = arith.extui %67 : vector<8x128xi1> to vector<8x128xi32>
    %69 = arith.addi %63, %68 : vector<8x128xi32>
    %70 = vector.extract_strided_slice %3 {offsets = [0, 10], sizes = [8, 1], strides = [1, 1]} : vector<8x16xi32> to vector<8x1xi32>
    %71 = vector.broadcast %70 : vector<8x1xi32> to vector<8x128xi32>
    %72 = vector.broadcast %8 : vector<1x128xi32> to vector<8x128xi32>
    %73 = arith.cmpi eq, %71, %72 : vector<8x128xi32>
    %74 = arith.extui %73 : vector<8x128xi1> to vector<8x128xi32>
    %75 = arith.addi %69, %74 : vector<8x128xi32>
    %76 = vector.extract_strided_slice %3 {offsets = [0, 11], sizes = [8, 1], strides = [1, 1]} : vector<8x16xi32> to vector<8x1xi32>
    %77 = vector.broadcast %76 : vector<8x1xi32> to vector<8x128xi32>
    %78 = vector.broadcast %8 : vector<1x128xi32> to vector<8x128xi32>
    %79 = arith.cmpi eq, %77, %78 : vector<8x128xi32>
    %80 = arith.extui %79 : vector<8x128xi1> to vector<8x128xi32>
    %81 = arith.addi %75, %80 : vector<8x128xi32>
    %82 = vector.extract_strided_slice %3 {offsets = [0, 12], sizes = [8, 1], strides = [1, 1]} : vector<8x16xi32> to vector<8x1xi32>
    %83 = vector.broadcast %82 : vector<8x1xi32> to vector<8x128xi32>
    %84 = vector.broadcast %8 : vector<1x128xi32> to vector<8x128xi32>
    %85 = arith.cmpi eq, %83, %84 : vector<8x128xi32>
    %86 = arith.extui %85 : vector<8x128xi1> to vector<8x128xi32>
    %87 = arith.addi %81, %86 : vector<8x128xi32>
    %88 = vector.extract_strided_slice %3 {offsets = [0, 13], sizes = [8, 1], strides = [1, 1]} : vector<8x16xi32> to vector<8x1xi32>
    %89 = vector.broadcast %88 : vector<8x1xi32> to vector<8x128xi32>
    %90 = vector.broadcast %8 : vector<1x128xi32> to vector<8x128xi32>
    %91 = arith.cmpi eq, %89, %90 : vector<8x128xi32>
    %92 = arith.extui %91 : vector<8x128xi1> to vector<8x128xi32>
    %93 = arith.addi %87, %92 : vector<8x128xi32>
    %94 = vector.extract_strided_slice %3 {offsets = [0, 14], sizes = [8, 1], strides = [1, 1]} : vector<8x16xi32> to vector<8x1xi32>
    %95 = vector.broadcast %94 : vector<8x1xi32> to vector<8x128xi32>
    %96 = vector.broadcast %8 : vector<1x128xi32> to vector<8x128xi32>
    %97 = arith.cmpi eq, %95, %96 : vector<8x128xi32>
    %98 = arith.extui %97 : vector<8x128xi1> to vector<8x128xi32>
    %99 = arith.addi %93, %98 : vector<8x128xi32>
    %100 = vector.extract_strided_slice %3 {offsets = [0, 15], sizes = [8, 1], strides = [1, 1]} : vector<8x16xi32> to vector<8x1xi32>
    %101 = vector.broadcast %100 : vector<8x1xi32> to vector<8x128xi32>
    %102 = vector.broadcast %8 : vector<1x128xi32> to vector<8x128xi32>
    %103 = arith.cmpi eq, %101, %102 : vector<8x128xi32>
    %104 = arith.extui %103 : vector<8x128xi1> to vector<8x128xi32>
    %105 = arith.addi %99, %104 : vector<8x128xi32>
    %106 = arith.sitofp %105 : vector<8x128xi32> to vector<8x128xf32>
    %107 = arith.truncf %106 : vector<8x128xf32> to vector<8x128xbf16>
    %c0_4 = arith.constant 0 : index
    %c0_5 = arith.constant 0 : index
    %108 = vector.load %arg10[%c0_4, %c0_5] : memref<8x128xf32, #tpu.memory_space<vmem>>, vector<8x128xf32>
    %c0_6 = arith.constant 0 : index
    %c0_7 = arith.constant 0 : index
    %109 = vector.load %arg4[%c0_6, %c0_7] : memref<128x128xbf16, #tpu.memory_space<vmem>>, vector<128x128xbf16>
    %cst = arith.constant dense<0.000000e+00> : vector<8x128xf32>
    %110 = tpu.matmul %107, %109, %cst {dimension_numbers = #tpu.dot_dimension_numbers<[1], [0], [0], [1], [0, 0, 1, 1], [], []>} : vector<8x128xbf16>, vector<128x128xbf16>, vector<8x128xf32> -> vector<8x128xf32>
    %111 = arith.addf %108, %110 : vector<8x128xf32>
    %c0_8 = arith.constant 0 : index
    %c0_9 = arith.constant 0 : index
    %112 = vector.load %arg10[%c0_8, %c0_9] : memref<8x128xf32, #tpu.memory_space<vmem>>, vector<8x128xf32>
    tpu.vector_store %arg10[%c0_8, %c0_9], %111 {strides = array<i32>} : memref<8x128xf32, #tpu.memory_space<vmem>>, vector<8x128xf32>,
    %c0_i32_10 = arith.constant 0 : i32
    %113 = arith.cmpi eq, %arg1, %c0_i32_10 : i32
    %114 = arith.extui %113 : i1 to i32
    %c0_i32_11 = arith.constant 0 : i32
    %115 = arith.cmpi ne, %114, %c0_i32_11 : i32
    scf.if %115 {
      %c0_12 = arith.constant 0 : index
      %c0_13 = arith.constant 0 : index
      %116 = vector.load %arg10[%c0_12, %c0_13] : memref<8x128xf32, #tpu.memory_space<vmem>>, vector<8x128xf32>
      %c0_14 = arith.constant 0 : index
      %c0_15 = arith.constant 0 : index
      %117 = vector.load %arg3[%c0_14, %c0_15] : memref<8x1xf32, #tpu.memory_space<vmem>>, vector<8x1xf32>
      %118 = vector.broadcast %117 : vector<8x1xf32> to vector<8x128xf32>
      %119 = arith.mulf %116, %118 : vector<8x128xf32>
      %c0_16 = arith.constant 0 : index
      %c0_17 = arith.constant 0 : index
      %120 = vector.load %arg5[%c0_16, %c0_17] : memref<128x128xf32, #tpu.memory_space<vmem>>, vector<128x128xf32>
      %cst_18 = arith.constant dense<0.000000e+00> : vector<8x128xf32>
      %121 = tpu.matmul %119, %120, %cst_18 {dimension_numbers = #tpu.dot_dimension_numbers<[1], [0], [0], [1], [0, 0, 1, 1], [], []>} : vector<8x128xf32>, vector<128x128xf32>, vector<8x128xf32> -> vector<8x128xf32>
      %c0_19 = arith.constant 0 : index
      %c0_20 = arith.constant 0 : index
      %122 = vector.load %arg6[%c0_19, %c0_20] : memref<1x128xf32, #tpu.memory_space<vmem>>, vector<1x128xf32>
      %123 = vector.broadcast %122 : vector<1x128xf32> to vector<8x128xf32>
      %124 = arith.addf %121, %123 : vector<8x128xf32>
      %cst_21 = arith.constant 0.000000e+00 : f32
      %125 = vector.broadcast %cst_21 : f32 to vector<8x128xf32>
      %126 = arith.maximumf %124, %125 : vector<8x128xf32>
      %c0_22 = arith.constant 0 : index
      %c0_23 = arith.constant 0 : index
      %127 = vector.load %arg7[%c0_22, %c0_23] : memref<128x128xf32, #tpu.memory_space<vmem>>, vector<128x128xf32>
      %cst_24 = arith.constant dense<0.000000e+00> : vector<8x128xf32>
      %128 = tpu.matmul %126, %127, %cst_24 {dimension_numbers = #tpu.dot_dimension_numbers<[1], [0], [0], [1], [0, 0, 1, 1], [], []>} : vector<8x128xf32>, vector<128x128xf32>, vector<8x128xf32> -> vector<8x128xf32>
      %c0_25 = arith.constant 0 : index
      %c0_26 = arith.constant 0 : index
      %129 = vector.load %arg8[%c0_25, %c0_26] : memref<1x128xf32, #tpu.memory_space<vmem>>, vector<1x128xf32>
      %130 = vector.broadcast %129 : vector<1x128xf32> to vector<8x128xf32>
      %131 = arith.addf %128, %130 : vector<8x128xf32>
      %c0_27 = arith.constant 0 : index
      %c0_28 = arith.constant 0 : index
      %132 = vector.load %arg9[%c0_27, %c0_28] : memref<8x128xf32, #tpu.memory_space<vmem>>, vector<8x128xf32>
      tpu.vector_store %arg9[%c0_27, %c0_28], %131 {strides = array<i32>} : memref<8x128xf32, #tpu.memory_space<vmem>>, vector<8x128xf32>,
    } else {
    }
    return
  }
  func.func @transform_0(%arg0: i32, %arg1: i32) -> (i32, i32) {
    %c0_i32 = arith.constant 0 : i32
    %c0_i32_0 = arith.constant 0 : i32
    return %arg0, %c0_i32 : i32, i32
  }
  func.func @transform_1(%arg0: i32, %arg1: i32) -> (i32, i32) {
    %c0_i32 = arith.constant 0 : i32
    %c0_i32_0 = arith.constant 0 : i32
    return %arg0, %c0_i32 : i32, i32
  }
  func.func @transform_2(%arg0: i32, %arg1: i32) -> (i32, i32) {
    %c0_i32 = arith.constant 0 : i32
    %c0_i32_0 = arith.constant 0 : i32
    return %arg1, %c0_i32 : i32, i32
  }
  func.func @transform_3(%arg0: i32, %arg1: i32) -> (i32, i32) {
    %c0_i32 = arith.constant 0 : i32
    %c0_i32_0 = arith.constant 0 : i32
    %c0_i32_1 = arith.constant 0 : i32
    return %c0_i32, %c0_i32_0 : i32, i32
  }
  func.func @transform_4(%arg0: i32, %arg1: i32) -> (i32, i32) {
    %c0_i32 = arith.constant 0 : i32
    %c0_i32_0 = arith.constant 0 : i32
    %c0_i32_1 = arith.constant 0 : i32
    return %c0_i32, %c0_i32_0 : i32, i32
  }
  func.func @transform_5(%arg0: i32, %arg1: i32) -> (i32, i32) {
    %c0_i32 = arith.constant 0 : i32
    %c0_i32_0 = arith.constant 0 : i32
    %c0_i32_1 = arith.constant 0 : i32
    return %c0_i32, %c0_i32_0 : i32, i32
  }
  func.func @transform_6(%arg0: i32, %arg1: i32) -> (i32, i32) {
    %c0_i32 = arith.constant 0 : i32
    %c0_i32_0 = arith.constant 0 : i32
    %c0_i32_1 = arith.constant 0 : i32
    return %c0_i32, %c0_i32_0 : i32, i32
  }
  func.func @transform_7(%arg0: i32, %arg1: i32) -> (i32, i32) {
    %c0_i32 = arith.constant 0 : i32
    %c0_i32_0 = arith.constant 0 : i32
    return %arg0, %c0_i32 : i32, i32
  }
}

</mosaic_0001>

<llo_original>
// kernel: tpu_custom_call.1
$region0: #{tpu_custom_call.1}
  #allocation0 [shape = 'u32[]', space=smem, size = 0x4, offset = 0x4, fixed_abs, tag = 'smem constant byte address 0x4 - core index']
  #allocation1 [shape = 'u32[144,128]{1,0:T(1,128)}', space=vmem, size = 0x12000, scoped, tag = 'internal scratch']
  #allocation2 [shape = 'f32[8,128]{1,0:T(8,128)}', space=vmem, size = 0x1000, scoped, tag = 'scratch operand']
  %s0 = inlined_call_operand.vmem [shape: s32[8,16], index: 0, kind: input, shape index: {}]
  %s1 = inlined_call_operand.vmem [shape: f32[8,1], index: 1, kind: input, shape index: {}]
  %s2 = inlined_call_operand.hbm [shape: bf16[128,128], index: 2, kind: input, shape index: {}]
  %s3 = inlined_call_operand.hbm [shape: f32[128,128], index: 3, kind: input, shape index: {}]
  %s4 = inlined_call_operand.vmem [shape: f32[1,128], index: 4, kind: input, shape index: {}]
  %s5 = inlined_call_operand.hbm [shape: f32[128,128], index: 5, kind: input, shape index: {}]
  %s6 = inlined_call_operand.vmem [shape: f32[1,128], index: 6, kind: input, shape index: {}]
  %s7 = inlined_call_operand.hbm [shape: f32[8,128], index: 7, kind: output, shape index: {}]
  %s8 = sld [smem:[#allocation0]]
  $region58: #{tpu_custom_call.1} parent=0
    _
  %s10 = ssub.s32 1, %s8
  %s11 = scalar_select 0, %s10, %s8
  $region1: #{tpu_custom_call.1} parent=0
    #allocation3 [shape = 'u8[32768]{0}', space=vmem, size = 0x8000, scoped, tag = 'input window, operand 2, single buffered']
    #allocation4 [shape = 's32[1]{0}', space=sflag, size = 0x4, scoped, tag = 'scoped memory for tpu_custom_call.1']
    #allocation5 [shape = 's32[1]{0}', space=sflag, size = 0x4, scoped, tag = 'scoped memory for tpu_custom_call.1']
    #allocation6 [shape = 'u8[65536]{0}', space=vmem, size = 0x10000, scoped, tag = 'input window, operand 3, single buffered']
    #allocation7 [shape = 's32[1]{0}', space=sflag, size = 0x4, scoped, tag = 'scoped memory for tpu_custom_call.1']
    #allocation8 [shape = 'u8[65536]{0}', space=vmem, size = 0x10000, scoped, tag = 'input window, operand 5, single buffered']
    #allocation9 [shape = 'u8[4096]{0}', space=vmem, size = 0x1000, scoped, tag = 'output window, operand 0, single buffered']
    %12 = vsyncpa [#allocation4], 0
    %13 = vsyncpa [#allocation7], 0
    %14 = vsyncpa [#allocation5], 0
    // Predicated region
    $region2: #{tpu_custom_call.1} parent=1 // pred_check
      _
    $region3: #{tpu_custom_call.1} parent=1 // pred_check_branch
      %16 = sbr.rel (0) target = $region5
    $region4: #{tpu_custom_call.1} parent=1 // pred_region
      _
    $region5: #{tpu_custom_call.1} parent=1 // pred_fallthru
      _
    // Predicated region
    $region6: #{tpu_custom_call.1} parent=1 // pred_check
      _
    $region7: #{tpu_custom_call.1} parent=1 // pred_check_branch
      %18 = sbr.rel (0) target = $region9
    $region8: #{tpu_custom_call.1} parent=1 // pred_region
      _
    $region9: #{tpu_custom_call.1} parent=1 // pred_fallthru
      _
    // Predicated region
    $region10: #{tpu_custom_call.1} parent=1 // pred_check
      _
    $region11: #{tpu_custom_call.1} parent=1 // pred_check_branch
      %20 = sbr.rel (0) target = $region13
    $region12: #{tpu_custom_call.1} parent=1 // pred_region
      %s22 = ssub.s32 1024, 1024
      %23 = vsyncadd [#allocation4], %s22
      %s24 = sshll.u32 [#allocation3], 4
      %s25 = int_to_ptr.vmem [resolvable:$true] %s24
      %30 = dma.hbm_to_vmem [thread:$0]  %s2, 1024, %s25, [#allocation4], 64, 64, 4
    $region13: #{tpu_custom_call.1} parent=1 // pred_fallthru
      _
    // Predicated region
    $region14: #{tpu_custom_call.1} parent=1 // pred_check
      _
    $region15: #{tpu_custom_call.1} parent=1 // pred_check_branch
      %32 = sbr.rel (0) target = $region17
    $region16: #{tpu_custom_call.1} parent=1 // pred_region
      %s34 = ssub.s32 2048, 2048
      %35 = vsyncadd [#allocation7], %s34
      %s36 = sshll.u32 [#allocation6], 4
      %s37 = int_to_ptr.vmem [resolvable:$true] %s36
      %42 = dma.hbm_to_vmem [thread:$0]  %s3, 2048, %s37, [#allocation7], 128, 128, 8
    $region17: #{tpu_custom_call.1} parent=1 // pred_fallthru
      _
    // Predicated region
    $region18: #{tpu_custom_call.1} parent=1 // pred_check
      _
    $region19: #{tpu_custom_call.1} parent=1 // pred_check_branch
      %44 = sbr.rel (0) target = $region21
    $region20: #{tpu_custom_call.1} parent=1 // pred_region
      _
    $region21: #{tpu_custom_call.1} parent=1 // pred_fallthru
      _
    // Predicated region
    $region22: #{tpu_custom_call.1} parent=1 // pred_check
      _
    $region23: #{tpu_custom_call.1} parent=1 // pred_check_branch
      %46 = sbr.rel (0) target = $region25
    $region24: #{tpu_custom_call.1} parent=1 // pred_region
      %s48 = ssub.s32 2048, 2048
      %49 = vsyncadd [#allocation7], %s48
      %s50 = sshll.u32 [#allocation8], 4
      %s51 = int_to_ptr.vmem [resolvable:$true] %s50
      %56 = dma.hbm_to_vmem [thread:$0]  %s5, 2048, %s51, [#allocation7], 128, 128, 8
    $region25: #{tpu_custom_call.1} parent=1 // pred_fallthru
      _
    // Predicated region
    $region26: #{tpu_custom_call.1} parent=1 // pred_check
      _
    $region27: #{tpu_custom_call.1} parent=1 // pred_check_branch
      %58 = sbr.rel (0) target = $region29
    $region28: #{tpu_custom_call.1} parent=1 // pred_region
      _
    $region29: #{tpu_custom_call.1} parent=1 // pred_fallthru
      _
    // Predicated region
    $region30: #{tpu_custom_call.1} parent=1 // pred_check
      _
    $region31: #{tpu_custom_call.1} parent=1 // pred_check_branch
      %60 = sbr.rel (0) target = $region33
    $region32: #{tpu_custom_call.1} parent=1 // pred_region
      %61 = dma.done [#allocation4], 1024
    $region33: #{tpu_custom_call.1} parent=1 // pred_fallthru
      _
    // Predicated region
    $region34: #{tpu_custom_call.1} parent=1 // pred_check
      _
    $region35: #{tpu_custom_call.1} parent=1 // pred_check_branch
      %63 = sbr.rel (0) target = $region37
    $region36: #{tpu_custom_call.1} parent=1 // pred_region
      %64 = dma.done [#allocation7], 2048
    $region37: #{tpu_custom_call.1} parent=1 // pred_fallthru
      _
    // Predicated region
    $region38: #{tpu_custom_call.1} parent=1 // pred_check
      _
    $region39: #{tpu_custom_call.1} parent=1 // pred_check_branch
      %66 = sbr.rel (0) target = $region41
    $region40: #{tpu_custom_call.1} parent=1 // pred_region
      %67 = dma.done [#allocation7], 2048
    $region41: #{tpu_custom_call.1} parent=1 // pred_fallthru
      _
    %p69 = scmp.eq.s32.totalorder 0, 0
    // Predicated region
    $region42: #{tpu_custom_call.1} parent=1 // pred_check
      %p70 = pneg %p69
    $region43: #{tpu_custom_call.1} parent=1 // pred_check_branch
      %72 = sbr.rel (%p70) target = $region45
    $region44: #{tpu_custom_call.1} parent=1 // pred_region
      %73 = vst [vmem:[#allocation2] sm:$0xff] 0.0
    $region45: #{tpu_custom_call.1} parent=1 // pred_fallthru
      _
    %v74 = vld [vmem:[%s0] sm:$0xff]
    %s75 = smul.u32 0, 128
    %v76 = vlaneseq
    %v77 = vand.u32 %v76, 127
    %v78 = vstv %s75
    %v79 = vadd.s32 %v77, %v78
    %80 = vset.pattern.permute.xlu0 0
    %81 = vperm.xlu0 %80, %v74
    %v82 = vpop.permute.xlu0 %81
    %vm83 = vcmp.eq.s32.totalorder %v82, %v79
    %v84 = vsel %vm83, 1, 0
    %85 = vset.pattern.permute.xlu0 1
    %86 = vperm.xlu0 %85, %v74
    %v87 = vpop.permute.xlu0 %86
    %vm88 = vcmp.eq.s32.totalorder %v87, %v79
    %v89 = vsel %vm88, 1, 0
    %v90 = vadd.s32 %v84, %v89
    %91 = vset.pattern.permute.xlu0 2
    %92 = vperm.xlu0 %91, %v74
    %v93 = vpop.permute.xlu0 %92
    %vm94 = vcmp.eq.s32.totalorder %v93, %v79
    %v95 = vsel %vm94, 1, 0
    %v96 = vadd.s32 %v90, %v95
    %97 = vset.pattern.permute.xlu0 3
    %98 = vperm.xlu0 %97, %v74
    %v99 = vpop.permute.xlu0 %98
    %vm100 = vcmp.eq.s32.totalorder %v99, %v79
    %v101 = vsel %vm100, 1, 0
    %v102 = vadd.s32 %v96, %v101
    %103 = vset.pattern.permute.xlu0 4
    %104 = vperm.xlu0 %103, %v74
    %v105 = vpop.permute.xlu0 %104
    %vm106 = vcmp.eq.s32.totalorder %v105, %v79
    %v107 = vsel %vm106, 1, 0
    %v108 = vadd.s32 %v102, %v107
    %109 = vset.pattern.permute.xlu0 5
    %110 = vperm.xlu0 %109, %v74
    %v111 = vpop.permute.xlu0 %110
    %vm112 = vcmp.eq.s32.totalorder %v111, %v79
    %v113 = vsel %vm112, 1, 0
    %v114 = vadd.s32 %v108, %v113
    %115 = vset.pattern.permute.xlu0 6
    %116 = vperm.xlu0 %115, %v74
    %v117 = vpop.permute.xlu0 %116
    %vm118 = vcmp.eq.s32.totalorder %v117, %v79
    %v119 = vsel %vm118, 1, 0
    %v120 = vadd.s32 %v114, %v119
    %121 = vset.pattern.permute.xlu0 7
    %122 = vperm.xlu0 %121, %v74
    %v123 = vpop.permute.xlu0 %122
    %vm124 = vcmp.eq.s32.totalorder %v123, %v79
    %v125 = vsel %vm124, 1, 0
    %v126 = vadd.s32 %v120, %v125
    %127 = vset.pattern.permute.xlu0 8
    %128 = vperm.xlu0 %127, %v74
    %v129 = vpop.permute.xlu0 %128
    %vm130 = vcmp.eq.s32.totalorder %v129, %v79
    %v131 = vsel %vm130, 1, 0
    %v132 = vadd.s32 %v126, %v131
    %133 = vset.pattern.permute.xlu0 9
    %134 = vperm.xlu0 %133, %v74
    %v135 = vpop.permute.xlu0 %134
    %vm136 = vcmp.eq.s32.totalorder %v135, %v79
    %v137 = vsel %vm136, 1, 0
    %v138 = vadd.s32 %v132, %v137
    %139 = vset.pattern.permute.xlu0 10
    %140 = vperm.xlu0 %139, %v74
    %v141 = vpop.permute.xlu0 %140
    %vm142 = vcmp.eq.s32.totalorder %v141, %v79
    %v143 = vsel %vm142, 1, 0
    %v144 = vadd.s32 %v138, %v143
    %145 = vset.pattern.permute.xlu0 11
    %146 = vperm.xlu0 %145, %v74
    %v147 = vpop.permute.xlu0 %146
    %vm148 = vcmp.eq.s32.totalorder %v147, %v79
    %v149 = vsel %vm148, 1, 0
    %v150 = vadd.s32 %v144, %v149
    %151 = vset.pattern.permute.xlu0 12
    %152 = vperm.xlu0 %151, %v74
    %v153 = vpop.permute.xlu0 %152
    %vm154 = vcmp.eq.s32.totalorder %v153, %v79
    %v155 = vsel %vm154, 1, 0
    %v156 = vadd.s32 %v150, %v155
    %157 = vset.pattern.permute.xlu0 13
    %158 = vperm.xlu0 %157, %v74
    %v159 = vpop.permute.xlu0 %158
    %vm160 = vcmp.eq.s32.totalorder %v159, %v79
    %v161 = vsel %vm160, 1, 0
    %v162 = vadd.s32 %v156, %v161
    %163 = vset.pattern.permute.xlu0 14
    %164 = vperm.xlu0 %163, %v74
    %v165 = vpop.permute.xlu0 %164
    %vm166 = vcmp.eq.s32.totalorder %v165, %v79
    %v167 = vsel %vm166, 1, 0
    %v168 = vadd.s32 %v162, %v167
    %169 = vset.pattern.permute.xlu0 15
    %170 = vperm.xlu0 %169, %v74
    %v171 = vpop.permute.xlu0 %170
    %vm172 = vcmp.eq.s32.totalorder %v171, %v79
    %v173 = vsel %vm172, 1, 0
    %v174 = vadd.s32 %v168, %v173
    %v175 = vcvt.s32.f32 %v174
    %v176 = vpack.c.bf16 %v175, %v175
    %v177 = vld [vmem:[#allocation2] sm:$0xff]
    %v178 = vld [vmem:[#allocation3] sm:$0xf]
    %v179 = vld [vmem:[#allocation3 + $0x4] sm:$0xf]
    %v180 = vld [vmem:[#allocation3 + $0x8] sm:$0xf]
    %v181 = vld [vmem:[#allocation3 + $0xc] sm:$0xf]
    %v182 = vld [vmem:[#allocation3 + $0x10] sm:$0xf]
    %v183 = vld [vmem:[#allocation3 + $0x14] sm:$0xf]
    %v184 = vld [vmem:[#allocation3 + $0x18] sm:$0xf]
    %v185 = vld [vmem:[#allocation3 + $0x1c] sm:$0xf]
    %v186 = vld [vmem:[#allocation3 + $0x20] sm:$0xf]
    %v187 = vld [vmem:[#allocation3 + $0x24] sm:$0xf]
    %v188 = vld [vmem:[#allocation3 + $0x28] sm:$0xf]
    %v189 = vld [vmem:[#allocation3 + $0x2c] sm:$0xf]
    %v190 = vld [vmem:[#allocation3 + $0x30] sm:$0xf]
    %v191 = vld [vmem:[#allocation3 + $0x34] sm:$0xf]
    %v192 = vld [vmem:[#allocation3 + $0x38] sm:$0xf]
    %v193 = vld [vmem:[#allocation3 + $0x3c] sm:$0xf]
    %v210 = vunpack.c.l.b16 %v178
    %v211 = vunpack.c.l.b16 %v179
    %v212 = vunpack.c.l.b16 %v180
    %v213 = vunpack.c.l.b16 %v181
    %v214 = vunpack.c.l.b16 %v182
    %v215 = vunpack.c.l.b16 %v183
    %v216 = vunpack.c.l.b16 %v184
    %v217 = vunpack.c.l.b16 %v185
    %v218 = vunpack.c.l.b16 %v186
    %v219 = vunpack.c.l.b16 %v187
    %v220 = vunpack.c.l.b16 %v188
    %v221 = vunpack.c.l.b16 %v189
    %v222 = vunpack.c.l.b16 %v190
    %v223 = vunpack.c.l.b16 %v191
    %v224 = vunpack.c.l.b16 %v192
    %v225 = vunpack.c.l.b16 %v193
    %v226 = vpack.c.b16 %v211, %v210
    %v227 = vpack.c.b16 %v213, %v212
    %v228 = vpack.c.b16 %v215, %v214
    %v229 = vpack.c.b16 %v217, %v216
    %v230 = vpack.c.b16 %v219, %v218
    %v231 = vpack.c.b16 %v221, %v220
    %v232 = vpack.c.b16 %v223, %v222
    %v233 = vpack.c.b16 %v225, %v224
    %242 = vmatprep.subr.bf16.mxu0 0
    %243 = vmatpush1.bf16.msra.mxu0 %v233
    %244 = vmatprep.subr.bf16.mxu0 0
    %245 = vmatpush1.bf16.msra.mxu0 %v232
    %246 = vmatprep.subr.bf16.mxu0 0
    %247 = vmatpush1.bf16.msra.mxu0 %v231
    %248 = vmatprep.subr.bf16.mxu0 0
    %249 = vmatpush1.bf16.msra.mxu0 %v230
    %250 = vmatprep.subr.bf16.mxu0 0
    %251 = vmatpush1.bf16.msra.mxu0 %v229
    %252 = vmatprep.subr.bf16.mxu0 0
    %253 = vmatpush1.bf16.msra.mxu0 %v228
    %254 = vmatprep.subr.bf16.mxu0 0
    %255 = vmatpush1.bf16.msra.mxu0 %v227
    %256 = vmatprep.subr.bf16.mxu0 0
    %257 = vmatpush1.bf16.msra.mxu0 %v226
    %258 = vmatprep.subr.bf16.mxu0 0
    %259 = vmatpush2.bf16.msra.mxu0 0
    %260 = vmatprep.subr.bf16.mxu0 0
    %261 = vmatpush2.bf16.msra.mxu0 0
    %262 = vmatprep.subr.bf16.mxu0 0
    %263 = vmatpush2.bf16.msra.mxu0 0
    %264 = vmatprep.subr.bf16.mxu0 0
    %265 = vmatpush2.bf16.msra.mxu0 0
    %266 = vmatprep.subr.bf16.mxu0 0
    %267 = vmatpush2.bf16.msra.mxu0 0
    %268 = vmatprep.subr.bf16.mxu0 0
    %269 = vmatpush2.bf16.msra.mxu0 0
    %270 = vmatprep.subr.bf16.mxu0 0
    %271 = vmatpush2.bf16.msra.mxu0 0
    %272 = vmatprep.subr.bf16.mxu0 0
    %273 = vmatpush2.bf16.msra.mxu0 0
    %274 = vmatprep.mubr.bf16.mxu0 0
    %275 = vmatmul.mubr.bf16.gmra.mxu0 %v176
    %v276 = vpop.f32.mrf.mxu0
    %v277 = vadd.f32 0.0, %v276
    %v278 = vpop.f32.mrf.mxu0
    %v279 = vpop.f32.mrf.mxu0
    %v280 = vpop.f32.mrf.mxu0
    %281 = vdwg.mxu0
    %v282 = vadd.f32 %v177, %v277
    %283 = vst [vmem:[#allocation2] sm:$0xff] %v282
    // Predicated region
    $region46: #{tpu_custom_call.1} parent=1 // pred_check
      %p284 = pneg %p69
    $region47: #{tpu_custom_call.1} parent=1 // pred_check_branch
      %286 = sbr.rel (%p284) target = $region49
    $region48: #{tpu_custom_call.1} parent=1 // pred_region
      %v287 = vld [vmem:[#allocation2] sm:$0xff]
      %v288 = vld [vmem:[%s1] sm:$0xff]
      %290 = vset.pattern.permute.xlu0 0
      %291 = vperm.xlu0 %290, %v288
      %v292 = vpop.permute.xlu0 %291
      %v294 = vmul.f32 %v287, %v292
      %v295 = vld [vmem:[#allocation6] sm:$0xff]
      %v296 = vld [vmem:[#allocation6 + $0x8] sm:$0xff]
      %v297 = vld [vmem:[#allocation6 + $0x10] sm:$0xff]
      %v298 = vld [vmem:[#allocation6 + $0x18] sm:$0xff]
      %v299 = vld [vmem:[#allocation6 + $0x20] sm:$0xff]
      %v300 = vld [vmem:[#allocation6 + $0x28] sm:$0xff]
      %v301 = vld [vmem:[#allocation6 + $0x30] sm:$0xff]
      %v302 = vld [vmem:[#allocation6 + $0x38] sm:$0xff]
      %v303 = vld [vmem:[#allocation6 + $0x40] sm:$0xff]
      %v304 = vld [vmem:[#allocation6 + $0x48] sm:$0xff]
      %v305 = vld [vmem:[#allocation6 + $0x50] sm:$0xff]
      %v306 = vld [vmem:[#allocation6 + $0x58] sm:$0xff]
      %v307 = vld [vmem:[#allocation6 + $0x60] sm:$0xff]
      %v308 = vld [vmem:[#allocation6 + $0x68] sm:$0xff]
      %v309 = vld [vmem:[#allocation6 + $0x70] sm:$0xff]
      %v310 = vld [vmem:[#allocation6 + $0x78] sm:$0xff]
      %v311 = vld [vmem:[%s4] sm:$0x1]
      %v313 = vlaneseq
      %v314 = vshrl.u32 %v313, 7
      %v315 = vsub.s32 0, %v314
      %v316 = vrot.slane %v311, %v315
      %318 = vmatprep.subr.mxu0 0.0
      %319 = vmatpush1.msra.mxu0 %v310
      %320 = vmatprep.subr.mxu0 0.0
      %321 = vmatpush1.msra.mxu0 %v309
      %322 = vmatprep.subr.mxu0 0.0
      %323 = vmatpush1.msra.mxu0 %v308
      %324 = vmatprep.subr.mxu0 0.0
      %325 = vmatpush1.msra.mxu0 %v307
      %326 = vmatprep.subr.mxu0 0.0
      %327 = vmatpush1.msra.mxu0 %v306
      %328 = vmatprep.subr.mxu0 0.0
      %329 = vmatpush1.msra.mxu0 %v305
      %330 = vmatprep.subr.mxu0 0.0
      %331 = vmatpush1.msra.mxu0 %v304
      %332 = vmatprep.subr.mxu0 0.0
      %333 = vmatpush1.msra.mxu0 %v303
      %334 = vmatprep.subr.mxu0 0.0
      %335 = vmatpush1.msra.mxu0 %v302
      %336 = vmatprep.subr.mxu0 0.0
      %337 = vmatpush1.msra.mxu0 %v301
      %338 = vmatprep.subr.mxu0 0.0
      %339 = vmatpush1.msra.mxu0 %v300
      %340 = vmatprep.subr.mxu0 0.0
      %341 = vmatpush1.msra.mxu0 %v299
      %342 = vmatprep.subr.mxu0 0.0
      %343 = vmatpush1.msra.mxu0 %v298
      %344 = vmatprep.subr.mxu0 0.0
      %345 = vmatpush1.msra.mxu0 %v297
      %346 = vmatprep.subr.mxu0 0.0
      %347 = vmatpush1.msra.mxu0 %v296
      %348 = vmatprep.subr.mxu0 0.0
      %349 = vmatpush1.msra.mxu0 %v295
      %350 = vmatprep.subr.mxu0 0.0
      %351 = vmatpush2.msra.mxu0 0.0
      %352 = vmatprep.subr.mxu0 0.0
      %353 = vmatpush2.msra.mxu0 0.0
      %354 = vmatprep.subr.mxu0 0.0
      %355 = vmatpush2.msra.mxu0 0.0
      %356 = vmatprep.subr.mxu0 0.0
      %357 = vmatpush2.msra.mxu0 0.0
      %358 = vmatprep.subr.mxu0 0.0
      %359 = vmatpush2.msra.mxu0 0.0
      %360 = vmatprep.subr.mxu0 0.0
      %361 = vmatpush2.msra.mxu0 0.0
      %362 = vmatprep.subr.mxu0 0.0
      %363 = vmatpush2.msra.mxu0 0.0
      %364 = vmatprep.subr.mxu0 0.0
      %365 = vmatpush2.msra.mxu0 0.0
      %366 = vmatprep.subr.mxu0 0.0
      %367 = vmatpush2.msra.mxu0 0.0
      %368 = vmatprep.subr.mxu0 0.0
      %369 = vmatpush2.msra.mxu0 0.0
      %370 = vmatprep.subr.mxu0 0.0
      %371 = vmatpush2.msra.mxu0 0.0
      %372 = vmatprep.subr.mxu0 0.0
      %373 = vmatpush2.msra.mxu0 0.0
      %374 = vmatprep.subr.mxu0 0.0
      %375 = vmatpush2.msra.mxu0 0.0
      %376 = vmatprep.subr.mxu0 0.0
      %377 = vmatpush2.msra.mxu0 0.0
      %378 = vmatprep.subr.mxu0 0.0
      %379 = vmatpush2.msra.mxu0 0.0
      %380 = vmatprep.subr.mxu0 0.0
      %381 = vmatpush2.msra.mxu0 0.0
      %382 = vmatprep.mubr.f32.mxu0 0.0
      %383 = vmatmul.mubr.f32.gmra.mxu0 %v294
      %v384 = vpop.f32.mrf.mxu0
      %v385 = vadd.f32 %v316, %v384
      %v386 = vpop.f32.mrf.mxu0
      %387 = vdwg.mxu0
      %v388 = vmax.f32 %v385, 0.0
      %v389 = vld [vmem:[#allocation8] sm:$0xff]
      %v390 = vld [vmem:[#allocation8 + $0x8] sm:$0xff]
      %v391 = vld [vmem:[#allocation8 + $0x10] sm:$0xff]
      %v392 = vld [vmem:[#allocation8 + $0x18] sm:$0xff]
      %v393 = vld [vmem:[#allocation8 + $0x20] sm:$0xff]
      %v394 = vld [vmem:[#allocation8 + $0x28] sm:$0xff]
      %v395 = vld [vmem:[#allocation8 + $0x30] sm:$0xff]
      %v396 = vld [vmem:[#allocation8 + $0x38] sm:$0xff]
      %v397 = vld [vmem:[#allocation8 + $0x40] sm:$0xff]
      %v398 = vld [vmem:[#allocation8 + $0x48] sm:$0xff]
      %v399 = vld [vmem:[#allocation8 + $0x50] sm:$0xff]
      %v400 = vld [vmem:[#allocation8 + $0x58] sm:$0xff]
      %v401 = vld [vmem:[#allocation8 + $0x60] sm:$0xff]
      %v402 = vld [vmem:[#allocation8 + $0x68] sm:$0xff]
      %v403 = vld [vmem:[#allocation8 + $0x70] sm:$0xff]
      %v404 = vld [vmem:[#allocation8 + $0x78] sm:$0xff]
      %v405 = vld [vmem:[%s6] sm:$0x1]
      %v407 = vlaneseq
      %v408 = vshrl.u32 %v407, 7
      %v409 = vsub.s32 0, %v408
      %v410 = vrot.slane %v405, %v409
      %412 = vmatprep.subr.mxu0 0.0
      %413 = vmatpush1.msra.mxu0 %v404
      %414 = vmatprep.subr.mxu0 0.0
      %415 = vmatpush1.msra.mxu0 %v403
      %416 = vmatprep.subr.mxu0 0.0
      %417 = vmatpush1.msra.mxu0 %v402
      %418 = vmatprep.subr.mxu0 0.0
      %419 = vmatpush1.msra.mxu0 %v401
      %420 = vmatprep.subr.mxu0 0.0
      %421 = vmatpush1.msra.mxu0 %v400
      %422 = vmatprep.subr.mxu0 0.0
      %423 = vmatpush1.msra.mxu0 %v399
      %424 = vmatprep.subr.mxu0 0.0
      %425 = vmatpush1.msra.mxu0 %v398
      %426 = vmatprep.subr.mxu0 0.0
      %427 = vmatpush1.msra.mxu0 %v397
      %428 = vmatprep.subr.mxu0 0.0
      %429 = vmatpush1.msra.mxu0 %v396
      %430 = vmatprep.subr.mxu0 0.0
      %431 = vmatpush1.msra.mxu0 %v395
      %432 = vmatprep.subr.mxu0 0.0
      %433 = vmatpush1.msra.mxu0 %v394
      %434 = vmatprep.subr.mxu0 0.0
      %435 = vmatpush1.msra.mxu0 %v393
      %436 = vmatprep.subr.mxu0 0.0
      %437 = vmatpush1.msra.mxu0 %v392
      %438 = vmatprep.subr.mxu0 0.0
      %439 = vmatpush1.msra.mxu0 %v391
      %440 = vmatprep.subr.mxu0 0.0
      %441 = vmatpush1.msra.mxu0 %v390
      %442 = vmatprep.subr.mxu0 0.0
      %443 = vmatpush1.msra.mxu0 %v389
      %444 = vmatprep.subr.mxu0 0.0
      %445 = vmatpush2.msra.mxu0 0.0
      %446 = vmatprep.subr.mxu0 0.0
      %447 = vmatpush2.msra.mxu0 0.0
      %448 = vmatprep.subr.mxu0 0.0
      %449 = vmatpush2.msra.mxu0 0.0
      %450 = vmatprep.subr.mxu0 0.0
      %451 = vmatpush2.msra.mxu0 0.0
      %452 = vmatprep.subr.mxu0 0.0
      %453 = vmatpush2.msra.mxu0 0.0
      %454 = vmatprep.subr.mxu0 0.0
      %455 = vmatpush2.msra.mxu0 0.0
      %456 = vmatprep.subr.mxu0 0.0
      %457 = vmatpush2.msra.mxu0 0.0
      %458 = vmatprep.subr.mxu0 0.0
      %459 = vmatpush2.msra.mxu0 0.0
      %460 = vmatprep.subr.mxu0 0.0
      %461 = vmatpush2.msra.mxu0 0.0
      %462 = vmatprep.subr.mxu0 0.0
      %463 = vmatpush2.msra.mxu0 0.0
      %464 = vmatprep.subr.mxu0 0.0
      %465 = vmatpush2.msra.mxu0 0.0
      %466 = vmatprep.subr.mxu0 0.0
      %467 = vmatpush2.msra.mxu0 0.0
      %468 = vmatprep.subr.mxu0 0.0
      %469 = vmatpush2.msra.mxu0 0.0
      %470 = vmatprep.subr.mxu0 0.0
      %471 = vmatpush2.msra.mxu0 0.0
      %472 = vmatprep.subr.mxu0 0.0
      %473 = vmatpush2.msra.mxu0 0.0
      %474 = vmatprep.subr.mxu0 0.0
      %475 = vmatpush2.msra.mxu0 0.0
      %476 = vmatprep.mubr.f32.mxu0 0.0
      %477 = vmatmul.mubr.f32.gmra.mxu0 %v388
      %v478 = vpop.f32.mrf.mxu0
      %v479 = vadd.f32 %v410, %v478
      %v480 = vpop.f32.mrf.mxu0
      %481 = vdwg.mxu0
      %482 = vst [vmem:[#allocation9] sm:$0xff] %v479
    $region49: #{tpu_custom_call.1} parent=1 // pred_fallthru
      _
    // Predicated region
    $region50: #{tpu_custom_call.1} parent=1 // pred_check
      _
    $region51: #{tpu_custom_call.1} parent=1 // pred_check_branch
      %484 = sbr.rel (0) target = $region53
    $region52: #{tpu_custom_call.1} parent=1 // pred_region
      %s486 = ssub.s32 128, 128
      %487 = vsyncadd [#allocation5], %s486
      %s489 = sshll.u32 [#allocation9], 4
      %s490 = int_to_ptr.vmem [resolvable:$true] %s489
      %492 = dma.vmem_to_hbm [thread:$0]  %s490, 128, %s7, [#allocation5]
    $region53: #{tpu_custom_call.1} parent=1 // pred_fallthru
      _
    // Predicated region
    $region54: #{tpu_custom_call.1} parent=1 // pred_check
      _
    $region55: #{tpu_custom_call.1} parent=1 // pred_check_branch
      %494 = sbr.rel (0) target = $region57
    $region56: #{tpu_custom_call.1} parent=1 // pred_region
      %495 = dma.done [#allocation5], 128
    $region57: #{tpu_custom_call.1} parent=1 // pred_fallthru
      _
    %496 = vsyncpa [#allocation4], 1
    %497 = vsyncpa [#allocation7], 1
    %498 = vsyncpa [#allocation5], 1

</llo_original>
